<compile_context>
chip_gen: v7x
topology: tpu7x:2x2x1
jax: 0.10.0
libtpu: 0.0.40
codegen_flags: <defaults>
</compile_context>

<pallas_src>
import jax
import jax.numpy as jnp
from jax.experimental import pallas as pl
from jax.experimental.pallas import tpu as pltpu


def _round_up(x: int, m: int) -> int:
    return ((x + m - 1) // m) * m


def _plan(B, F_in, F_out, tm, tn, tk):
    """Pick tile sizes (and padded problem sizes) for y = x @ W^T + b."""
    # bf16-friendly sublane multiple on the batch tile.
    tm = min(tm, _round_up(B, 16))
    # Small-batch (decode-style) regime is W-bandwidth-bound: use fat W tiles
    # so HBM DMA, not per-grid-step overhead, dominates.
    if tm <= 64:
        tn = max(tn, 512)
        tk = max(tk, 2048)
    tn = min(tn, _round_up(F_out, 128))
    tk = min(tk, _round_up(F_in, 128))
    # Megacore: if there is only one i block, keep >= 2 j blocks when N allows
    # so both TensorCores (v7x) get work on the "parallel" grid axes.
    n128 = _round_up(F_out, 128)
    if _round_up(B, tm) == tm and n128 >= 2 * 128:
        tn = min(tn, _round_up(n128 // 2, 128))
    Bp = _round_up(B, tm)
    Np = _round_up(F_out, tn)
    Kp = _round_up(F_in, tk)
    return tm, tn, tk, Bp, Np, Kp


def prepare_linear_params(weight, bias, *, tn, tk, compute_dtype):
    """One-time prep of static params: transpose to (F_in, F_out), pad, cast.

    In a real model this should be hoisted to parameter init so the transpose
    / pad / cast HBM passes are never paid on the forward path.
    """
    F_out, F_in = weight.shape
    Np = _round_up(F_out, tn)
    Kp = _round_up(F_in, tk)
    wT = weight.T  # (F_in, F_out)
    if (Kp, Np) != (F_in, F_out):
        wT = jnp.pad(wT, ((0, Kp - F_in), (0, Np - F_out)))
    wT = wT.astype(compute_dtype)
    b = bias
    if Np != F_out:
        b = jnp.pad(bias, (0, Np - F_out))
    b = b.reshape(1, Np).astype(jnp.float32)
    return wT, b


def _linear_kernel_f32out(x_ref, w_ref, b_ref, o_ref):
    # x_ref: (tm, tk)  w_ref: (tk, tn)  b_ref: (1, tn)  o_ref: (tm, tn) f32
    # f32 output: accumulate directly into the resident output block.
    k = pl.program_id(2)

    @pl.when(k == 0)
    def _():
        o_ref[...] = jnp.broadcast_to(b_ref[...], o_ref.shape)

    o_ref[...] += jnp.dot(x_ref[...], w_ref[...],
                          preferred_element_type=jnp.float32)


def _linear_kernel_acc(x_ref, w_ref, b_ref, o_ref, acc_ref):
    # Narrow output dtype: keep an f32 VMEM accumulator, cast on last K step.
    k = pl.program_id(2)

    @pl.when(k == 0)
    def _():
        acc_ref[...] = jnp.broadcast_to(b_ref[...], acc_ref.shape)

    acc_ref[...] += jnp.dot(x_ref[...], w_ref[...],
                            preferred_element_type=jnp.float32)

    @pl.when(k == pl.num_programs(2) - 1)
    def _():
        o_ref[...] = acc_ref[...].astype(o_ref.dtype)


def plain_block(x, weight, bias, *, tm=512, tn=512, tk=1024,
                compute_dtype=jnp.bfloat16, vmem_limit_bytes=None):
    """y = x @ weight.T + bias  (PyTorch nn.Linear semantics).

    x:      (B, F_in)
    weight: (F_out, F_in)   -- PyTorch layout
    bias:   (F_out,)
    """
    B, F_in = x.shape
    F_out, F_in_w = weight.shape
    assert F_in_w == F_in
    assert bias.shape == (F_out,)
    out_dtype = x.dtype

    tm, tn, tk, Bp, Np, Kp = _plan(B, F_in, F_out, tm, tn, tk)

    # Static-parameter prep (transpose + pad + cast): amortize to init in a
    # real model; done here so this function stays a drop-in forward.
    wT_p, b_p = prepare_linear_params(
        weight, bias, tn=tn, tk=tk, compute_dtype=compute_dtype)

    x_p = x
    if (Bp, Kp) != (B, F_in):
        x_p = jnp.pad(x, ((0, Bp - B), (0, Kp - F_in)))
    if x_p.dtype != compute_dtype:
        x_p = x_p.astype(compute_dtype)

    grid = (Bp // tm, Np // tn, Kp // tk)

    use_scratch = out_dtype != jnp.float32
    kernel = _linear_kernel_acc if use_scratch else _linear_kernel_f32out
    scratch = [pltpu.VMEM((tm, tn), jnp.float32)] if use_scratch else []

    c_item = jnp.dtype(compute_dtype).itemsize
    cost = pl.CostEstimate(
        flops=2 * B * F_in * F_out,
        transcendentals=0,
        bytes_accessed=(B * F_in * c_item + F_in * F_out * c_item
                        + F_out * 4 + B * F_out * jnp.dtype(out_dtype).itemsize),
    )

    compiler_kwargs = dict(
        dimension_semantics=("parallel", "parallel", "arbitrary"))
    if vmem_limit_bytes is not None:
        compiler_kwargs["vmem_limit_bytes"] = vmem_limit_bytes

    out_p = pl.pallas_call(
        kernel,
        out_shape=jax.ShapeDtypeStruct((Bp, Np), out_dtype),
        grid_spec=pltpu.PrefetchScalarGridSpec(
            num_scalar_prefetch=0,
            grid=grid,
            in_specs=[
                pl.BlockSpec((tm, tk), lambda i, j, k: (i, k)),   # x
                pl.BlockSpec((tk, tn), lambda i, j, k: (k, j)),   # W^T (prepped)
                pl.BlockSpec((1, tn), lambda i, j, k: (0, j)),    # bias
            ],
            out_specs=pl.BlockSpec((tm, tn), lambda i, j, k: (i, j)),
            scratch_shapes=scratch,
        ),
        compiler_params=pltpu.CompilerParams(**compiler_kwargs),
        cost_estimate=cost,
    )(x_p, wT_p, b_p)

    if (Bp, Np) != (B, F_out):
        out_p = out_p[:B, :F_out]
    return out_p


if __name__ == "__main__":
    size = 32
    batch = 8

    key = jax.random.PRNGKey(0)
    kx, kw, kb = jax.random.split(key, 3)

    # Deterministic synthetic parameters (nn.Linear(size, size) shapes).
    x = jax.random.normal(kx, (batch, size), dtype=jnp.float32)
    weight = jax.random.normal(kw, (size, size), dtype=jnp.float32) * 0.1
    bias = jax.random.normal(kb, (size,), dtype=jnp.float32) * 0.1

    y_ref = x @ weight.T + bias

    # Default bf16-MXU path (f32 accumulation): loose tolerance.
    y = jax.block_until_ready(plain_block(x, weight, bias))
    assert y.shape == y_ref.shape, "shape mismatch vs reference"
    assert jnp.allclose(y, y_ref, atol=2e-2, rtol=2e-2), "bf16 path mismatch"

    # Exact f32 path for a tight correctness check.
    y32 = jax.block_until_ready(
        plain_block(x, weight, bias, compute_dtype=jnp.float32))
    assert jnp.allclose(y32, y_ref, atol=1e-5, rtol=1e-5), "f32 path mismatch"

    print("KERNEL_OK")
</pallas_src>

<mosaic_0001>
module attributes {stable_mosaic.version = 11 : i64} {
  func.func @_linear_kernel_f32out(%arg0: i32, %arg1: i32, %arg2: i32, %arg3: memref<16x128xbf16, #tpu.memory_space<vmem>>, %arg4: memref<128x128xbf16, #tpu.memory_space<vmem>>, %arg5: memref<1x128xf32, #tpu.memory_space<vmem>>, %arg6: memref<16x128xf32, #tpu.memory_space<vmem>>) attributes {dimension_semantics = [#tpu.dimension_semantics<parallel>, #tpu.dimension_semantics<parallel>, #tpu.dimension_semantics<arbitrary>], iteration_bounds = array<i64: 1, 1, 1>, scalar_prefetch = 0 : i64, scratch_operands = 0 : i64, tpu.core_type = #tpu.core_type<tc>, window_params = [{transform_indices = @transform_0, window_bounds = array<i64: 16, 128>}, {transform_indices = @transform_1, window_bounds = array<i64: 128, 128>}, {transform_indices = @transform_2, window_bounds = array<i64: 1, 128>}, {transform_indices = @transform_3, window_bounds = array<i64: 16, 128>}]} {
    %c0_i32 = arith.constant 0 : i32
    %0 = arith.cmpi eq, %arg2, %c0_i32 : i32
    %1 = arith.extui %0 : i1 to i32
    %c0_i32_0 = arith.constant 0 : i32
    %2 = arith.cmpi ne, %1, %c0_i32_0 : i32
    scf.if %2 {
      %c0_8 = arith.constant 0 : index
      %c0_9 = arith.constant 0 : index
      %9 = vector.load %arg5[%c0_8, %c0_9] : memref<1x128xf32, #tpu.memory_space<vmem>>, vector<1x128xf32>
      %10 = vector.shape_cast %9 : vector<1x128xf32> to vector<1x128xf32>
      %11 = vector.broadcast %10 : vector<1x128xf32> to vector<16x128xf32>
      %c0_10 = arith.constant 0 : index
      %c0_11 = arith.constant 0 : index
      %12 = vector.load %arg6[%c0_10, %c0_11] : memref<16x128xf32, #tpu.memory_space<vmem>>, vector<16x128xf32>
      tpu.vector_store %arg6[%c0_10, %c0_11], %11 {strides = array<i32>} : memref<16x128xf32, #tpu.memory_space<vmem>>, vector<16x128xf32>,
    } else {
    }
    %c0 = arith.constant 0 : index
    %c0_1 = arith.constant 0 : index
    %3 = vector.load %arg6[%c0, %c0_1] : memref<16x128xf32, #tpu.memory_space<vmem>>, vector<16x128xf32>
    %c0_2 = arith.constant 0 : index
    %c0_3 = arith.constant 0 : index
    %4 = vector.load %arg3[%c0_2, %c0_3] : memref<16x128xbf16, #tpu.memory_space<vmem>>, vector<16x128xbf16>
    %c0_4 = arith.constant 0 : index
    %c0_5 = arith.constant 0 : index
    %5 = vector.load %arg4[%c0_4, %c0_5] : memref<128x128xbf16, #tpu.memory_space<vmem>>, vector<128x128xbf16>
    %cst = arith.constant dense<0.000000e+00> : vector<16x128xf32>
    %6 = tpu.matmul %4, %5, %cst {dimension_numbers = #tpu.dot_dimension_numbers<[1], [0], [0], [1], [0, 0, 1, 1], [], []>} : vector<16x128xbf16>, vector<128x128xbf16>, vector<16x128xf32> -> vector<16x128xf32>
    %7 = arith.addf %3, %6 : vector<16x128xf32>
    %c0_6 = arith.constant 0 : index
    %c0_7 = arith.constant 0 : index
    %8 = vector.load %arg6[%c0_6, %c0_7] : memref<16x128xf32, #tpu.memory_space<vmem>>, vector<16x128xf32>
    tpu.vector_store %arg6[%c0_6, %c0_7], %7 {strides = array<i32>} : memref<16x128xf32, #tpu.memory_space<vmem>>, vector<16x128xf32>,
    return
  }
  func.func @transform_0(%arg0: i32, %arg1: i32, %arg2: i32) -> (i32, i32) {
    %c0_i32 = arith.constant 0 : i32
    return %arg0, %arg2 : i32, i32
  }
  func.func @transform_1(%arg0: i32, %arg1: i32, %arg2: i32) -> (i32, i32) {
    %c0_i32 = arith.constant 0 : i32
    return %arg2, %arg1 : i32, i32
  }
  func.func @transform_2(%arg0: i32, %arg1: i32, %arg2: i32) -> (i32, i32) {
    %c0_i32 = arith.constant 0 : i32
    %c0_i32_0 = arith.constant 0 : i32
    return %c0_i32, %arg1 : i32, i32
  }
  func.func @transform_3(%arg0: i32, %arg1: i32, %arg2: i32) -> (i32, i32) {
    %c0_i32 = arith.constant 0 : i32
    return %arg0, %arg1 : i32, i32
  }
}

</mosaic_0001>

<llo_original>
// kernel: tpu_custom_call.1
$region0: #{tpu_custom_call.1}
  #allocation0 [shape = 'u32[]', space=smem, size = 0x4, offset = 0x4, fixed_abs, tag = 'smem constant byte address 0x4 - core index']
  #allocation1 [shape = 'u32[144,128]{1,0:T(1,128)}', space=vmem, size = 0x12000, scoped, tag = 'internal scratch']
  %s0 = inlined_call_operand.hbm [shape: bf16[16,128], index: 0, kind: input, shape index: {}]
  %s1 = inlined_call_operand.hbm [shape: bf16[128,128], index: 1, kind: input, shape index: {}]
  %s2 = inlined_call_operand.vmem [shape: f32[1,128], index: 2, kind: input, shape index: {}]
  %s3 = inlined_call_operand.hbm [shape: f32[16,128], index: 3, kind: output, shape index: {}]
  %s4 = sld [smem:[#allocation0]]
  $region34: #{tpu_custom_call.1} parent=0
    _
  %s6 = ssub.s32 1, %s4
  %s7 = scalar_select 0, %s6, %s4
  $region1: #{tpu_custom_call.1} parent=0
    #allocation2 [shape = 'u8[4096]{0}', space=vmem, size = 0x1000, scoped, tag = 'input window, operand 0, single buffered']
    #allocation3 [shape = 's32[1]{0}', space=sflag, size = 0x4, scoped, tag = 'scoped memory for tpu_custom_call.1']
    #allocation4 [shape = 's32[1]{0}', space=sflag, size = 0x4, scoped, tag = 'scoped memory for tpu_custom_call.1']
    #allocation5 [shape = 'u8[32768]{0}', space=vmem, size = 0x8000, scoped, tag = 'input window, operand 1, single buffered']
    #allocation6 [shape = 's32[1]{0}', space=sflag, size = 0x4, scoped, tag = 'scoped memory for tpu_custom_call.1']
    #allocation7 [shape = 'u8[8192]{0}', space=vmem, size = 0x2000, scoped, tag = 'output window, operand 0, single buffered']
    %8 = vsyncpa [#allocation3], 0
    %9 = vsyncpa [#allocation6], 0
    %10 = vsyncpa [#allocation4], 0
    // Predicated region
    $region2: #{tpu_custom_call.1} parent=1 // pred_check
      _
    $region3: #{tpu_custom_call.1} parent=1 // pred_check_branch
      %12 = sbr.rel (0) target = $region5
    $region4: #{tpu_custom_call.1} parent=1 // pred_region
      %s14 = ssub.s32 128, 128
      %15 = vsyncadd [#allocation3], %s14
      %s16 = sshll.u32 [#allocation2], 4
      %s17 = int_to_ptr.vmem [resolvable:$true] %s16
      %22 = dma.hbm_to_vmem [thread:$0]  %s0, 128, %s17, [#allocation3], 64, 64, 4
    $region5: #{tpu_custom_call.1} parent=1 // pred_fallthru
      _
    // Predicated region
    $region6: #{tpu_custom_call.1} parent=1 // pred_check
      _
    $region7: #{tpu_custom_call.1} parent=1 // pred_check_branch
      %24 = sbr.rel (0) target = $region9
    $region8: #{tpu_custom_call.1} parent=1 // pred_region
      %s26 = ssub.s32 1024, 1024
      %27 = vsyncadd [#allocation6], %s26
      %s28 = sshll.u32 [#allocation5], 4
      %s29 = int_to_ptr.vmem [resolvable:$true] %s28
      %34 = dma.hbm_to_vmem [thread:$0]  %s1, 1024, %s29, [#allocation6], 64, 64, 4
    $region9: #{tpu_custom_call.1} parent=1 // pred_fallthru
      _
    // Predicated region
    $region10: #{tpu_custom_call.1} parent=1 // pred_check
      _
    $region11: #{tpu_custom_call.1} parent=1 // pred_check_branch
      %36 = sbr.rel (0) target = $region13
    $region12: #{tpu_custom_call.1} parent=1 // pred_region
      _
    $region13: #{tpu_custom_call.1} parent=1 // pred_fallthru
      _
    // Predicated region
    $region14: #{tpu_custom_call.1} parent=1 // pred_check
      _
    $region15: #{tpu_custom_call.1} parent=1 // pred_check_branch
      %38 = sbr.rel (0) target = $region17
    $region16: #{tpu_custom_call.1} parent=1 // pred_region
      %39 = dma.done [#allocation3], 128
    $region17: #{tpu_custom_call.1} parent=1 // pred_fallthru
      _
    // Predicated region
    $region18: #{tpu_custom_call.1} parent=1 // pred_check
      _
    $region19: #{tpu_custom_call.1} parent=1 // pred_check_branch
      %41 = sbr.rel (0) target = $region21
    $region20: #{tpu_custom_call.1} parent=1 // pred_region
      %42 = dma.done [#allocation6], 1024
    $region21: #{tpu_custom_call.1} parent=1 // pred_fallthru
      _
    %p44 = scmp.eq.s32.totalorder 0, 0
    // Predicated region
    $region22: #{tpu_custom_call.1} parent=1 // pred_check
      %p45 = pneg %p44
    $region23: #{tpu_custom_call.1} parent=1 // pred_check_branch
      %47 = sbr.rel (%p45) target = $region25
    $region24: #{tpu_custom_call.1} parent=1 // pred_region
      %v48 = vld [vmem:[%s2] sm:$0x1]
      %v50 = vlaneseq
      %v51 = vshrl.u32 %v50, 7
      %v52 = vsub.s32 0, %v51
      %v53 = vrot.slane %v48, %v52
      %55 = vst [vmem:[#allocation7] sm:$0xff] %v53
      %56 = vst [vmem:[#allocation7 + $0x8] sm:$0xff] %v53
    $region25: #{tpu_custom_call.1} parent=1 // pred_fallthru
      _
    %v57 = vld [vmem:[#allocation7] sm:$0xff]
    %v58 = vld [vmem:[#allocation7 + $0x8] sm:$0xff]
    %v59 = vld [vmem:[#allocation2] sm:$0xf]
    %v60 = vld [vmem:[#allocation2 + $0x4] sm:$0xf]
    %v61 = vld [vmem:[#allocation5] sm:$0xf]
    %v62 = vld [vmem:[#allocation5 + $0x4] sm:$0xf]
    %v63 = vld [vmem:[#allocation5 + $0x8] sm:$0xf]
    %v64 = vld [vmem:[#allocation5 + $0xc] sm:$0xf]
    %v65 = vld [vmem:[#allocation5 + $0x10] sm:$0xf]
    %v66 = vld [vmem:[#allocation5 + $0x14] sm:$0xf]
    %v67 = vld [vmem:[#allocation5 + $0x18] sm:$0xf]
    %v68 = vld [vmem:[#allocation5 + $0x1c] sm:$0xf]
    %v69 = vld [vmem:[#allocation5 + $0x20] sm:$0xf]
    %v70 = vld [vmem:[#allocation5 + $0x24] sm:$0xf]
    %v71 = vld [vmem:[#allocation5 + $0x28] sm:$0xf]
    %v72 = vld [vmem:[#allocation5 + $0x2c] sm:$0xf]
    %v73 = vld [vmem:[#allocation5 + $0x30] sm:$0xf]
    %v74 = vld [vmem:[#allocation5 + $0x34] sm:$0xf]
    %v75 = vld [vmem:[#allocation5 + $0x38] sm:$0xf]
    %v76 = vld [vmem:[#allocation5 + $0x3c] sm:$0xf]
    %v79 = vunpack.c.l.b16 %v59
    %v80 = vunpack.c.l.b16 %v60
    %v81 = vpack.c.b16 %v80, %v79
    %v99 = vunpack.c.l.b16 %v61
    %v100 = vunpack.c.l.b16 %v62
    %v101 = vunpack.c.l.b16 %v63
    %v102 = vunpack.c.l.b16 %v64
    %v103 = vunpack.c.l.b16 %v65
    %v104 = vunpack.c.l.b16 %v66
    %v105 = vunpack.c.l.b16 %v67
    %v106 = vunpack.c.l.b16 %v68
    %v107 = vunpack.c.l.b16 %v69
    %v108 = vunpack.c.l.b16 %v70
    %v109 = vunpack.c.l.b16 %v71
    %v110 = vunpack.c.l.b16 %v72
    %v111 = vunpack.c.l.b16 %v73
    %v112 = vunpack.c.l.b16 %v74
    %v113 = vunpack.c.l.b16 %v75
    %v114 = vunpack.c.l.b16 %v76
    %v115 = vpack.c.b16 %v100, %v99
    %v116 = vpack.c.b16 %v102, %v101
    %v117 = vpack.c.b16 %v104, %v103
    %v118 = vpack.c.b16 %v106, %v105
    %v119 = vpack.c.b16 %v108, %v107
    %v120 = vpack.c.b16 %v110, %v109
    %v121 = vpack.c.b16 %v112, %v111
    %v122 = vpack.c.b16 %v114, %v113
    %131 = vmatprep.subr.bf16.mxu0 0
    %132 = vmatpush1.bf16.msra.mxu0 %v115
    %133 = vmatprep.subr.bf16.mxu0 0
    %134 = vmatpush1.bf16.msra.mxu0 %v116
    %135 = vmatprep.subr.bf16.mxu0 0
    %136 = vmatpush1.bf16.msra.mxu0 %v117
    %137 = vmatprep.subr.bf16.mxu0 0
    %138 = vmatpush1.bf16.msra.mxu0 %v118
    %139 = vmatprep.subr.bf16.mxu0 0
    %140 = vmatpush1.bf16.msra.mxu0 %v119
    %141 = vmatprep.subr.bf16.mxu0 0
    %142 = vmatpush1.bf16.msra.mxu0 %v120
    %143 = vmatprep.subr.bf16.mxu0 0
    %144 = vmatpush1.bf16.msra.mxu0 %v121
    %145 = vmatprep.subr.bf16.mxu0 0
    %146 = vmatpush1.bf16.msra.mxu0 %v122
    %147 = vmatprep.subr.bf16.mxu0 0
    %148 = vmatpush1.bf16.msra.mxu0 0
    %149 = vmatprep.subr.bf16.mxu0 0
    %150 = vmatpush1.bf16.msra.mxu0 0
    %151 = vmatprep.subr.bf16.mxu0 0
    %152 = vmatpush1.bf16.msra.mxu0 0
    %153 = vmatprep.subr.bf16.mxu0 0
    %154 = vmatpush1.bf16.msra.mxu0 0
    %155 = vmatprep.subr.bf16.mxu0 0
    %156 = vmatpush1.bf16.msra.mxu0 0
    %157 = vmatprep.subr.bf16.mxu0 0
    %158 = vmatpush1.bf16.msra.mxu0 0
    %159 = vmatprep.subr.bf16.mxu0 0
    %160 = vmatpush1.bf16.msra.mxu0 0
    %161 = vmatprep.subr.bf16.mxu0 0
    %162 = vmatpush1.bf16.msra.mxu0 0
    %163 = vmatprep.mubr.bf16.mxu0 0
    %164 = vmatmul.mubr.bf16.gmra.mrb[0].mxu0 %v81
    %v165 = vpop.f32.mrb[0].mxu0
    %v166 = vadd.f32 0.0, %v165
    %v167 = vpop.f32.mrb[0].mxu0
    %v168 = vpop.f32.mrb[0].mxu0
    %v169 = vadd.f32 0.0, %v168
    %v170 = vpop.f32.mrb[0].mxu0
    %171 = vdwg.mxu0
    %v172 = vadd.f32 %v57, %v166
    %v173 = vadd.f32 %v58, %v169
    %174 = vst [vmem:[#allocation7] sm:$0xff] %v172
    %175 = vst [vmem:[#allocation7 + $0x8] sm:$0xff] %v173
    // Predicated region
    $region26: #{tpu_custom_call.1} parent=1 // pred_check
      _
    $region27: #{tpu_custom_call.1} parent=1 // pred_check_branch
      %177 = sbr.rel (0) target = $region29
    $region28: #{tpu_custom_call.1} parent=1 // pred_region
      %s179 = ssub.s32 256, 256
      %180 = vsyncadd [#allocation4], %s179
      %s181 = sshll.u32 [#allocation7], 4
      %s182 = int_to_ptr.vmem [resolvable:$true] %s181
      %187 = dma.vmem_to_hbm [thread:$0]  %s182, 256, %s3, [#allocation4], 128, 128, 8
    $region29: #{tpu_custom_call.1} parent=1 // pred_fallthru
      _
    // Predicated region
    $region30: #{tpu_custom_call.1} parent=1 // pred_check
      _
    $region31: #{tpu_custom_call.1} parent=1 // pred_check_branch
      %189 = sbr.rel (0) target = $region33
    $region32: #{tpu_custom_call.1} parent=1 // pred_region
      %190 = dma.done [#allocation4], 256
    $region33: #{tpu_custom_call.1} parent=1 // pred_fallthru
      _
    %191 = vsyncpa [#allocation3], 1
    %192 = vsyncpa [#allocation6], 1
    %193 = vsyncpa [#allocation4], 1

</llo_original>
